<compile_context>
chip_gen: v5e
topology: v5e:2x2
jax: 0.10.0
libtpu: 0.0.40
codegen_flags: <defaults>
</compile_context>

<pallas_src>
import functools

import jax
import jax.numpy as jnp
from jax.experimental import pallas as pl
from jax.experimental.pallas import tpu as pltpu


def _round_up(n, m):
    return (n + m - 1) // m * m


def _actor_kernel(x_ref, w1_ref, b1_ref, w2_ref, b2_ref, wh_ref, bh_ref,
                  out_ref, *, act):
    """One batch tile: two tanh Linear layers + fused (mu|sigma) head."""
    x = x_ref[...]

    # Layer 1: Linear + Tanh  (f32 accumulation on the MXU)
    h1 = jnp.tanh(
        jnp.dot(x, w1_ref[...], preferred_element_type=jnp.float32)
        + b1_ref[...]
    )

    # Layer 2: Linear + Tanh  (cast to operand dtype so bf16 path stays bf16)
    h2 = jnp.tanh(
        jnp.dot(h1.astype(w2_ref.dtype), w2_ref[...],
                preferred_element_type=jnp.float32)
        + b2_ref[...]
    )

    # Fused head: one matmul into a lane-dense (TB, 128) slab.
    # Columns [0, act)        -> mu logits     -> sigmoid
    # Columns [act, 2*act)    -> sigma pre-act -> softplus + 0.01
    # Columns [2*act, 128)    -> zero padding  (discarded by the wrapper)
    z = (jnp.dot(h2.astype(wh_ref.dtype), wh_ref[...],
                 preferred_element_type=jnp.float32)
         + bh_ref[...])

    col = jax.lax.broadcasted_iota(jnp.int32, z.shape, 1)
    mu_act = jax.nn.sigmoid(z)
    sg_act = jnp.logaddexp(z, 0.0) + 0.01          # stable softplus + 0.01
    out_ref[...] = jnp.where(col < act, mu_act, sg_act).astype(out_ref.dtype)


def actor_forward(x, params, *, block_b=256, compute_dtype=jnp.float32):
    """x: (B, obs_shape) float32. Returns (mu, sigma), each (B, action_shape)."""
    B, obs = x.shape
    hidden = params["w1"].shape[1]
    act = params["wmu"].shape[1]
    head_pad = max(128, _round_up(2 * act, 128))   # lane-dense head width

    # --- fuse + zero-pad the two heads into one matmul (tiny, wrapper-side) ---
    wh = jnp.zeros((hidden, head_pad), jnp.float32)
    wh = wh.at[:, :act].set(params["wmu"]).at[:, act:2 * act].set(params["wsig"])
    bh = jnp.zeros((1, head_pad), jnp.float32)
    bh = bh.at[:, :act].set(params["bmu"]).at[:, act:2 * act].set(params["bsig"])

    # --- batch tiling (f32 sublane = 8); pad B so every tile is full ---------
    tb = min(block_b, _round_up(B, 8))
    b_pad = _round_up(B, tb)
    if b_pad != B:
        x = jnp.pad(x, ((0, b_pad - B), (0, 0)))

    w1, w2 = params["w1"], params["w2"]
    if compute_dtype != jnp.float32:
        x = x.astype(compute_dtype)
        w1 = w1.astype(compute_dtype)
        w2 = w2.astype(compute_dtype)
        wh = wh.astype(compute_dtype)

    grid = (b_pad // tb,)
    kernel = functools.partial(_actor_kernel, act=act)

    out = pl.pallas_call(
        kernel,
        out_shape=jax.ShapeDtypeStruct((b_pad, head_pad), jnp.float32),
        grid_spec=pltpu.PrefetchScalarGridSpec(
            num_scalar_prefetch=0,
            grid=grid,
            in_specs=[
                pl.BlockSpec((tb, obs), lambda i: (i, 0)),          # x tile
                pl.BlockSpec(w1.shape, lambda i: (0, 0)),           # resident
                pl.BlockSpec(params["b1"].shape, lambda i: (0, 0)),
                pl.BlockSpec(w2.shape, lambda i: (0, 0)),
                pl.BlockSpec(params["b2"].shape, lambda i: (0, 0)),
                pl.BlockSpec(wh.shape, lambda i: (0, 0)),
                pl.BlockSpec(bh.shape, lambda i: (0, 0)),
            ],
            out_specs=pl.BlockSpec((tb, head_pad), lambda i: (i, 0)),
        ),
        compiler_params=pltpu.CompilerParams(
            dimension_semantics=("parallel",),
        ),
    )(x, w1, params["b1"], w2, params["b2"], wh, bh)

    mu = out[:B, :act]
    sigma = out[:B, act:2 * act]
    return mu, sigma


def init_params(key, obs_shape, action_shape, hidden_num):
    """Deterministic init mimicking nn.Linear's U(-1/sqrt(fan_in), 1/sqrt(fan_in))."""
    ks = jax.random.split(key, 8)

    def lin(kw, kb, fan_in, fan_out):
        bound = 1.0 / jnp.sqrt(fan_in)
        w = jax.random.uniform(kw, (fan_in, fan_out), jnp.float32, -bound, bound)
        b = jax.random.uniform(kb, (1, fan_out), jnp.float32, -bound, bound)
        return w, b

    w1, b1 = lin(ks[0], ks[1], obs_shape, hidden_num)
    w2, b2 = lin(ks[2], ks[3], hidden_num, hidden_num)
    wmu, bmu = lin(ks[4], ks[5], hidden_num, action_shape)
    wsig, bsig = lin(ks[6], ks[7], hidden_num, action_shape)
    return {"w1": w1, "b1": b1, "w2": w2, "b2": b2,
            "wmu": wmu, "bmu": bmu, "wsig": wsig, "bsig": bsig}


def actor_forward_ref(x, p):
    """Pure-JAX reference for correctness check."""
    h1 = jnp.tanh(x @ p["w1"] + p["b1"])
    h2 = jnp.tanh(h1 @ p["w2"] + p["b2"])
    mu = jax.nn.sigmoid(h2 @ p["wmu"] + p["bmu"])
    sigma = jax.nn.softplus(h2 @ p["wsig"] + p["bsig"]) + 0.01
    return mu, sigma


if __name__ == "__main__":
    key = jax.random.PRNGKey(0)
    k_params, k_x1, k_x2 = jax.random.split(key, 3)

    OBS = 32         # obs_shape
    ACT = 8          # action_shape
    HIDDEN = 128     # hidden_num (module default)

    params = init_params(k_params, OBS, ACT, HIDDEN)

    # small batch (single tile)
    B = 8
    x = jax.random.normal(k_x1, (B, OBS), jnp.float32)
    mu, sigma = actor_forward(x, params)
    jax.block_until_ready((mu, sigma))
    mu_ref, sigma_ref = actor_forward_ref(x, params)
    assert mu.shape == (B, ACT) and sigma.shape == (B, ACT)
    assert jnp.allclose(mu, mu_ref, atol=1e-5, rtol=1e-5)
    assert jnp.allclose(sigma, sigma_ref, atol=1e-5, rtol=1e-5)

    # batch not divisible by 8 -> exercises the wrapper-side padding path
    B2 = 37
    x2 = jax.random.normal(k_x2, (B2, OBS), jnp.float32)
    mu2, sigma2 = actor_forward(x2, params)
    jax.block_until_ready((mu2, sigma2))
    mu2_ref, sigma2_ref = actor_forward_ref(x2, params)
    assert mu2.shape == (B2, ACT) and sigma2.shape == (B2, ACT)
    assert jnp.allclose(mu2, mu2_ref, atol=1e-5, rtol=1e-5)
    assert jnp.allclose(sigma2, sigma2_ref, atol=1e-5, rtol=1e-5)

    print("KERNEL_OK")
</pallas_src>

<mosaic_0001>
module attributes {stable_mosaic.version = 11 : i64} {
  func.func @_actor_kernel(%arg0: i32, %arg1: memref<8x32xf32, #tpu.memory_space<vmem>>, %arg2: memref<32x128xf32, #tpu.memory_space<vmem>>, %arg3: memref<1x128xf32, #tpu.memory_space<vmem>>, %arg4: memref<128x128xf32, #tpu.memory_space<vmem>>, %arg5: memref<1x128xf32, #tpu.memory_space<vmem>>, %arg6: memref<128x128xf32, #tpu.memory_space<vmem>>, %arg7: memref<1x128xf32, #tpu.memory_space<vmem>>, %arg8: memref<8x128xf32, #tpu.memory_space<vmem>>) attributes {dimension_semantics = [#tpu.dimension_semantics<parallel>], iteration_bounds = array<i64: 1>, scalar_prefetch = 0 : i64, scratch_operands = 0 : i64, tpu.core_type = #tpu.core_type<tc>, window_params = [{transform_indices = @transform_0, window_bounds = array<i64: 8, 32>}, {pipeline_mode = #tpu.pipeline_mode<synchronous>, transform_indices = @transform_1, window_bounds = array<i64: 32, 128>}, {pipeline_mode = #tpu.pipeline_mode<synchronous>, transform_indices = @transform_2, window_bounds = array<i64: 1, 128>}, {pipeline_mode = #tpu.pipeline_mode<synchronous>, transform_indices = @transform_3, window_bounds = array<i64: 128, 128>}, {pipeline_mode = #tpu.pipeline_mode<synchronous>, transform_indices = @transform_4, window_bounds = array<i64: 1, 128>}, {pipeline_mode = #tpu.pipeline_mode<synchronous>, transform_indices = @transform_5, window_bounds = array<i64: 128, 128>}, {pipeline_mode = #tpu.pipeline_mode<synchronous>, transform_indices = @transform_6, window_bounds = array<i64: 1, 128>}, {transform_indices = @transform_7, window_bounds = array<i64: 8, 128>}]} {
    %c0 = arith.constant 0 : index
    %c0_0 = arith.constant 0 : index
    %0 = vector.load %arg1[%c0, %c0_0] : memref<8x32xf32, #tpu.memory_space<vmem>>, vector<8x32xf32>
    %c0_1 = arith.constant 0 : index
    %c0_2 = arith.constant 0 : index
    %1 = vector.load %arg2[%c0_1, %c0_2] : memref<32x128xf32, #tpu.memory_space<vmem>>, vector<32x128xf32>
    %cst = arith.constant dense<0.000000e+00> : vector<8x128xf32>
    %2 = tpu.matmul %0, %1, %cst {dimension_numbers = #tpu.dot_dimension_numbers<[1], [0], [0], [1], [0, 0, 1, 1], [], []>} : vector<8x32xf32>, vector<32x128xf32>, vector<8x128xf32> -> vector<8x128xf32>
    %c0_3 = arith.constant 0 : index
    %c0_4 = arith.constant 0 : index
    %3 = vector.load %arg3[%c0_3, %c0_4] : memref<1x128xf32, #tpu.memory_space<vmem>>, vector<1x128xf32>
    %4 = vector.broadcast %3 : vector<1x128xf32> to vector<8x128xf32>
    %5 = arith.addf %2, %4 : vector<8x128xf32>
    %6 = math.tanh %5 : vector<8x128xf32>
    %c0_5 = arith.constant 0 : index
    %c0_6 = arith.constant 0 : index
    %7 = vector.load %arg4[%c0_5, %c0_6] : memref<128x128xf32, #tpu.memory_space<vmem>>, vector<128x128xf32>
    %cst_7 = arith.constant dense<0.000000e+00> : vector<8x128xf32>
    %8 = tpu.matmul %6, %7, %cst_7 {dimension_numbers = #tpu.dot_dimension_numbers<[1], [0], [0], [1], [0, 0, 1, 1], [], []>} : vector<8x128xf32>, vector<128x128xf32>, vector<8x128xf32> -> vector<8x128xf32>
    %c0_8 = arith.constant 0 : index
    %c0_9 = arith.constant 0 : index
    %9 = vector.load %arg5[%c0_8, %c0_9] : memref<1x128xf32, #tpu.memory_space<vmem>>, vector<1x128xf32>
    %10 = vector.broadcast %9 : vector<1x128xf32> to vector<8x128xf32>
    %11 = arith.addf %8, %10 : vector<8x128xf32>
    %12 = math.tanh %11 : vector<8x128xf32>
    %c0_10 = arith.constant 0 : index
    %c0_11 = arith.constant 0 : index
    %13 = vector.load %arg6[%c0_10, %c0_11] : memref<128x128xf32, #tpu.memory_space<vmem>>, vector<128x128xf32>
    %cst_12 = arith.constant dense<0.000000e+00> : vector<8x128xf32>
    %14 = tpu.matmul %12, %13, %cst_12 {dimension_numbers = #tpu.dot_dimension_numbers<[1], [0], [0], [1], [0, 0, 1, 1], [], []>} : vector<8x128xf32>, vector<128x128xf32>, vector<8x128xf32> -> vector<8x128xf32>
    %c0_13 = arith.constant 0 : index
    %c0_14 = arith.constant 0 : index
    %15 = vector.load %arg7[%c0_13, %c0_14] : memref<1x128xf32, #tpu.memory_space<vmem>>, vector<1x128xf32>
    %16 = vector.broadcast %15 : vector<1x128xf32> to vector<8x128xf32>
    %17 = arith.addf %14, %16 : vector<8x128xf32>
    %18 = tpu.iota {dimensions = array<i32: 1>} : vector<8x128xi32>
    %19 = arith.negf %17 : vector<8x128xf32>
    %20 = math.exp %19 : vector<8x128xf32>
    %cst_15 = arith.constant 1.000000e+00 : f32
    %21 = vector.broadcast %cst_15 : f32 to vector<8x128xf32>
    %22 = arith.addf %21, %20 : vector<8x128xf32>
    %23 = arith.divf %21, %22 : vector<8x128xf32>
    %cst_16 = arith.constant 0.000000e+00 : f32
    %24 = vector.broadcast %cst_16 : f32 to vector<8x128xf32>
    %25 = arith.maximumf %17, %24 : vector<8x128xf32>
    %26 = vector.broadcast %cst_16 : f32 to vector<8x128xf32>
    %27 = arith.subf %17, %26 : vector<8x128xf32>
    %28 = arith.cmpf one, %27, %27 : vector<8x128xf32>
    %29 = vector.broadcast %cst_16 : f32 to vector<8x128xf32>
    %30 = arith.addf %17, %29 : vector<8x128xf32>
    %31 = math.absf %27 : vector<8x128xf32>
    %cst_17 = arith.constant 0.000000e+00 : f32
    %32 = vector.broadcast %cst_17 : f32 to vector<8x128xf32>
    %33 = arith.subf %32, %31 : vector<8x128xf32>
    %34 = math.exp %33 : vector<8x128xf32>
    %35 = math.log1p %34 : vector<8x128xf32>
    %36 = arith.addf %25, %35 : vector<8x128xf32>
    %37 = arith.select %28, %30, %36 : vector<8x128xi1>, vector<8x128xf32>
    %cst_18 = arith.constant 0.00999999977 : f32
    %38 = vector.broadcast %cst_18 : f32 to vector<8x128xf32>
    %39 = arith.addf %37, %38 : vector<8x128xf32>
    %c8_i32 = arith.constant 8 : i32
    %40 = vector.broadcast %c8_i32 : i32 to vector<8x128xi32>
    %41 = arith.cmpi slt, %18, %40 : vector<8x128xi32>
    %42 = arith.select %41, %23, %39 : vector<8x128xi1>, vector<8x128xf32>
    %c0_19 = arith.constant 0 : index
    %c0_20 = arith.constant 0 : index
    %43 = vector.load %arg8[%c0_19, %c0_20] : memref<8x128xf32, #tpu.memory_space<vmem>>, vector<8x128xf32>
    tpu.vector_store %arg8[%c0_19, %c0_20], %42 {strides = array<i32>} : memref<8x128xf32, #tpu.memory_space<vmem>>, vector<8x128xf32>,
    return
  }
  func.func @transform_0(%arg0: i32) -> (i32, i32) {
    %c0_i32 = arith.constant 0 : i32
    %c0_i32_0 = arith.constant 0 : i32
    return %arg0, %c0_i32 : i32, i32
  }
  func.func @transform_1(%arg0: i32) -> (i32, i32) {
    %c0_i32 = arith.constant 0 : i32
    %c0_i32_0 = arith.constant 0 : i32
    %c0_i32_1 = arith.constant 0 : i32
    return %c0_i32, %c0_i32_0 : i32, i32
  }
  func.func @transform_2(%arg0: i32) -> (i32, i32) {
    %c0_i32 = arith.constant 0 : i32
    %c0_i32_0 = arith.constant 0 : i32
    %c0_i32_1 = arith.constant 0 : i32
    return %c0_i32, %c0_i32_0 : i32, i32
  }
  func.func @transform_3(%arg0: i32) -> (i32, i32) {
    %c0_i32 = arith.constant 0 : i32
    %c0_i32_0 = arith.constant 0 : i32
    %c0_i32_1 = arith.constant 0 : i32
    return %c0_i32, %c0_i32_0 : i32, i32
  }
  func.func @transform_4(%arg0: i32) -> (i32, i32) {
    %c0_i32 = arith.constant 0 : i32
    %c0_i32_0 = arith.constant 0 : i32
    %c0_i32_1 = arith.constant 0 : i32
    return %c0_i32, %c0_i32_0 : i32, i32
  }
  func.func @transform_5(%arg0: i32) -> (i32, i32) {
    %c0_i32 = arith.constant 0 : i32
    %c0_i32_0 = arith.constant 0 : i32
    %c0_i32_1 = arith.constant 0 : i32
    return %c0_i32, %c0_i32_0 : i32, i32
  }
  func.func @transform_6(%arg0: i32) -> (i32, i32) {
    %c0_i32 = arith.constant 0 : i32
    %c0_i32_0 = arith.constant 0 : i32
    %c0_i32_1 = arith.constant 0 : i32
    return %c0_i32, %c0_i32_0 : i32, i32
  }
  func.func @transform_7(%arg0: i32) -> (i32, i32) {
    %c0_i32 = arith.constant 0 : i32
    %c0_i32_0 = arith.constant 0 : i32
    return %arg0, %c0_i32 : i32, i32
  }
}

</mosaic_0001>

<llo_original>
// kernel: tpu_custom_call.1
$region0: #{tpu_custom_call.1}
  #allocation0 [shape = 'u32[]', space=smem, size = 0x4, offset = 0x4, fixed_abs, tag = 'smem constant byte address 0x4 - core index']
  #allocation1 [shape = 'u32[72,128]{1,0:T(1,128)}', space=vmem, size = 0x9000, scoped, tag = 'internal scratch']
  %s0 = inlined_call_operand.hbm [shape: f32[8,32], index: 0, kind: input, shape index: {}]
  %s1 = inlined_call_operand.hbm [shape: f32[32,128], index: 1, kind: input, shape index: {}]
  %s2 = inlined_call_operand.vmem [shape: f32[1,128], index: 2, kind: input, shape index: {}]
  %s3 = inlined_call_operand.hbm [shape: f32[128,128], index: 3, kind: input, shape index: {}]
  %s4 = inlined_call_operand.vmem [shape: f32[1,128], index: 4, kind: input, shape index: {}]
  %s5 = inlined_call_operand.hbm [shape: f32[128,128], index: 5, kind: input, shape index: {}]
  %s6 = inlined_call_operand.vmem [shape: f32[1,128], index: 6, kind: input, shape index: {}]
  %s7 = inlined_call_operand.hbm [shape: f32[8,128], index: 7, kind: output, shape index: {}]
  %s8 = sld [smem:[#allocation0]]
  $region54: #{tpu_custom_call.1} parent=0
    _
  %s10 = ssub.s32 1, %s8
  %s11 = scalar_select 0, %s10, %s8
  $region1: #{tpu_custom_call.1} parent=0
    #allocation2 [shape = 'u8[4096]{0}', space=vmem, size = 0x1000, scoped, tag = 'input window, operand 0, single buffered']
    #allocation3 [shape = 's32[1]{0}', space=sflag, size = 0x4, scoped, tag = 'scoped memory for tpu_custom_call.1']
    #allocation4 [shape = 's32[1]{0}', space=sflag, size = 0x4, scoped, tag = 'scoped memory for tpu_custom_call.1']
    #allocation5 [shape = 'u8[16384]{0}', space=vmem, size = 0x4000, scoped, tag = 'input window, operand 1, single buffered']
    #allocation6 [shape = 's32[1]{0}', space=sflag, size = 0x4, scoped, tag = 'scoped memory for tpu_custom_call.1']
    #allocation7 [shape = 'u8[65536]{0}', space=vmem, size = 0x10000, scoped, tag = 'input window, operand 3, single buffered']
    #allocation8 [shape = 'u8[65536]{0}', space=vmem, size = 0x10000, scoped, tag = 'input window, operand 5, single buffered']
    #allocation9 [shape = 's32[1]{0}', space=sflag, size = 0x4, scoped, tag = 'scoped memory for tpu_custom_call.1']
    #allocation10 [shape = 'u8[4096]{0}', space=vmem, size = 0x1000, scoped, tag = 'output window, operand 0, single buffered']
    %12 = vsyncpa [#allocation3], 0
    %13 = vsyncpa [#allocation6], 0
    %14 = vsyncpa [#allocation9], 0
    %15 = vsyncpa [#allocation4], 0
    // Predicated region
    $region2: #{tpu_custom_call.1} parent=1 // pred_check
      _
    $region3: #{tpu_custom_call.1} parent=1 // pred_check_branch
      %17 = sbr.rel (0) target = $region5
    $region4: #{tpu_custom_call.1} parent=1 // pred_region
      %19 = vsyncadd [#allocation3], 0
      %s21 = sshll.u32 %s0, 4
      %s22 = int_to_ptr.hbm [resolvable:$true] %s21
      %s23 = sshll.u32 [#allocation2], 4
      %s24 = int_to_ptr.vmem [resolvable:$true] %s23
      %26 = dma.hbm_to_vmem [thread:$0]  %s22, 128, %s24, [#allocation3]
    $region5: #{tpu_custom_call.1} parent=1 // pred_fallthru
      _
    // Predicated region
    $region6: #{tpu_custom_call.1} parent=1 // pred_check
      _
    $region7: #{tpu_custom_call.1} parent=1 // pred_check_branch
      %28 = sbr.rel (0) target = $region9
    $region8: #{tpu_custom_call.1} parent=1 // pred_region
      %30 = vsyncadd [#allocation6], 0
      %s31 = sshll.u32 %s1, 4
      %s32 = int_to_ptr.hbm [resolvable:$true] %s31
      %s33 = sshll.u32 [#allocation5], 4
      %s34 = int_to_ptr.vmem [resolvable:$true] %s33
      %39 = dma.hbm_to_vmem [thread:$0]  %s32, 512, %s34, [#allocation6], 128, 128, 8
    $region9: #{tpu_custom_call.1} parent=1 // pred_fallthru
      _
    // Predicated region
    $region10: #{tpu_custom_call.1} parent=1 // pred_check
      _
    $region11: #{tpu_custom_call.1} parent=1 // pred_check_branch
      %41 = sbr.rel (0) target = $region13
    $region12: #{tpu_custom_call.1} parent=1 // pred_region
      _
    $region13: #{tpu_custom_call.1} parent=1 // pred_fallthru
      _
    // Predicated region
    $region14: #{tpu_custom_call.1} parent=1 // pred_check
      _
    $region15: #{tpu_custom_call.1} parent=1 // pred_check_branch
      %43 = sbr.rel (0) target = $region17
    $region16: #{tpu_custom_call.1} parent=1 // pred_region
      %45 = vsyncadd [#allocation6], 0
      %s46 = sshll.u32 %s3, 4
      %s47 = int_to_ptr.hbm [resolvable:$true] %s46
      %s48 = sshll.u32 [#allocation7], 4
      %s49 = int_to_ptr.vmem [resolvable:$true] %s48
      %54 = dma.hbm_to_vmem [thread:$0]  %s47, 2048, %s49, [#allocation6], 128, 128, 8
    $region17: #{tpu_custom_call.1} parent=1 // pred_fallthru
      _
    // Predicated region
    $region18: #{tpu_custom_call.1} parent=1 // pred_check
      _
    $region19: #{tpu_custom_call.1} parent=1 // pred_check_branch
      %56 = sbr.rel (0) target = $region21
    $region20: #{tpu_custom_call.1} parent=1 // pred_region
      _
    $region21: #{tpu_custom_call.1} parent=1 // pred_fallthru
      _
    // Predicated region
    $region22: #{tpu_custom_call.1} parent=1 // pred_check
      _
    $region23: #{tpu_custom_call.1} parent=1 // pred_check_branch
      %58 = sbr.rel (0) target = $region25
    $region24: #{tpu_custom_call.1} parent=1 // pred_region
      %60 = vsyncadd [#allocation9], 0
      %s61 = sshll.u32 %s5, 4
      %s62 = int_to_ptr.hbm [resolvable:$true] %s61
      %s63 = sshll.u32 [#allocation8], 4
      %s64 = int_to_ptr.vmem [resolvable:$true] %s63
      %69 = dma.hbm_to_vmem [thread:$0]  %s62, 2048, %s64, [#allocation9], 128, 128, 8
    $region25: #{tpu_custom_call.1} parent=1 // pred_fallthru
      _
    // Predicated region
    $region26: #{tpu_custom_call.1} parent=1 // pred_check
      _
    $region27: #{tpu_custom_call.1} parent=1 // pred_check_branch
      %71 = sbr.rel (0) target = $region29
    $region28: #{tpu_custom_call.1} parent=1 // pred_region
      _
    $region29: #{tpu_custom_call.1} parent=1 // pred_fallthru
      _
    // Predicated region
    $region30: #{tpu_custom_call.1} parent=1 // pred_check
      _
    $region31: #{tpu_custom_call.1} parent=1 // pred_check_branch
      %73 = sbr.rel (0) target = $region33
    $region32: #{tpu_custom_call.1} parent=1 // pred_region
      %75 = dma.done [#allocation3], 128
    $region33: #{tpu_custom_call.1} parent=1 // pred_fallthru
      _
    // Predicated region
    $region34: #{tpu_custom_call.1} parent=1 // pred_check
      _
    $region35: #{tpu_custom_call.1} parent=1 // pred_check_branch
      %77 = sbr.rel (0) target = $region37
    $region36: #{tpu_custom_call.1} parent=1 // pred_region
      %79 = dma.done [#allocation6], 512
    $region37: #{tpu_custom_call.1} parent=1 // pred_fallthru
      _
    // Predicated region
    $region38: #{tpu_custom_call.1} parent=1 // pred_check
      _
    $region39: #{tpu_custom_call.1} parent=1 // pred_check_branch
      %81 = sbr.rel (0) target = $region41
    $region40: #{tpu_custom_call.1} parent=1 // pred_region
      %83 = dma.done [#allocation6], 2048
    $region41: #{tpu_custom_call.1} parent=1 // pred_fallthru
      _
    // Predicated region
    $region42: #{tpu_custom_call.1} parent=1 // pred_check
      _
    $region43: #{tpu_custom_call.1} parent=1 // pred_check_branch
      %85 = sbr.rel (0) target = $region45
    $region44: #{tpu_custom_call.1} parent=1 // pred_region
      %87 = dma.done [#allocation9], 2048
    $region45: #{tpu_custom_call.1} parent=1 // pred_fallthru
      _
    %v88 = vld [vmem:[#allocation2] sm:$0xff]
    %v89 = vld [vmem:[#allocation5] sm:$0xff]
    %v90 = vld [vmem:[#allocation5 + $0x8] sm:$0xff]
    %v91 = vld [vmem:[#allocation5 + $0x10] sm:$0xff]
    %v92 = vld [vmem:[#allocation5 + $0x18] sm:$0xff]
    %v93 = vld [vmem:[%s2] sm:$0x1]
    %v95 = vperm.slane %v93, 0
    %vm97 = vcmask 261120
    %v99 = vsel %vm97, %v88, 0
    %101 = vmatpush.msra.mxu0 0.0
    %102 = vmatpush.msra.mxu0 0.0
    %103 = vmatpush.msra.mxu0 0.0
    %104 = vmatpush.msra.mxu0 0.0
    %105 = vmatpush.msra.mxu0 0.0
    %106 = vmatpush.msra.mxu0 0.0
    %107 = vmatpush.msra.mxu0 0.0
    %108 = vmatpush.msra.mxu0 0.0
    %109 = vmatpush.msra.mxu0 0.0
    %110 = vmatpush.msra.mxu0 0.0
    %111 = vmatpush.msra.mxu0 0.0
    %112 = vmatpush.msra.mxu0 0.0
    %113 = vmatpush.msra.mxu0 %v92
    %114 = vmatpush.msra.mxu0 %v91
    %115 = vmatpush.msra.mxu0 %v90
    %116 = vmatpush.msra.mxu0 %v89
    %117 = vmatmul.f32.gmra.mxu0 %v99
    %v118 = vpop.f32.mrf.mxu0
    %v119 = vadd.f32 %v95, %v118
    %120 = vdwg.mxu0
    %v121 = vtanh.pop %v119
    %v122 = vld [vmem:[#allocation7] sm:$0xff]
    %v123 = vld [vmem:[#allocation7 + $0x8] sm:$0xff]
    %v124 = vld [vmem:[#allocation7 + $0x10] sm:$0xff]
    %v125 = vld [vmem:[#allocation7 + $0x18] sm:$0xff]
    %v126 = vld [vmem:[#allocation7 + $0x20] sm:$0xff]
    %v127 = vld [vmem:[#allocation7 + $0x28] sm:$0xff]
    %v128 = vld [vmem:[#allocation7 + $0x30] sm:$0xff]
    %v129 = vld [vmem:[#allocation7 + $0x38] sm:$0xff]
    %v130 = vld [vmem:[#allocation7 + $0x40] sm:$0xff]
    %v131 = vld [vmem:[#allocation7 + $0x48] sm:$0xff]
    %v132 = vld [vmem:[#allocation7 + $0x50] sm:$0xff]
    %v133 = vld [vmem:[#allocation7 + $0x58] sm:$0xff]
    %v134 = vld [vmem:[#allocation7 + $0x60] sm:$0xff]
    %v135 = vld [vmem:[#allocation7 + $0x68] sm:$0xff]
    %v136 = vld [vmem:[#allocation7 + $0x70] sm:$0xff]
    %v137 = vld [vmem:[#allocation7 + $0x78] sm:$0xff]
    %v138 = vld [vmem:[%s4] sm:$0x1]
    %v140 = vperm.slane %v138, 0
    %142 = vmatpush.msra.mxu0 %v137
    %143 = vmatpush.msra.mxu0 %v136
    %144 = vmatpush.msra.mxu0 %v135
    %145 = vmatpush.msra.mxu0 %v134
    %146 = vmatpush.msra.mxu0 %v133
    %147 = vmatpush.msra.mxu0 %v132
    %148 = vmatpush.msra.mxu0 %v131
    %149 = vmatpush.msra.mxu0 %v130
    %150 = vmatpush.msra.mxu0 %v129
    %151 = vmatpush.msra.mxu0 %v128
    %152 = vmatpush.msra.mxu0 %v127
    %153 = vmatpush.msra.mxu0 %v126
    %154 = vmatpush.msra.mxu0 %v125
    %155 = vmatpush.msra.mxu0 %v124
    %156 = vmatpush.msra.mxu0 %v123
    %157 = vmatpush.msra.mxu0 %v122
    %158 = vmatmul.f32.gmra.mxu0 %v121
    %v159 = vpop.f32.mrf.mxu0
    %v160 = vadd.f32 %v140, %v159
    %161 = vdwg.mxu0
    %v162 = vtanh.pop %v160
    %v163 = vld [vmem:[#allocation8] sm:$0xff]
    %v164 = vld [vmem:[#allocation8 + $0x8] sm:$0xff]
    %v165 = vld [vmem:[#allocation8 + $0x10] sm:$0xff]
    %v166 = vld [vmem:[#allocation8 + $0x18] sm:$0xff]
    %v167 = vld [vmem:[#allocation8 + $0x20] sm:$0xff]
    %v168 = vld [vmem:[#allocation8 + $0x28] sm:$0xff]
    %v169 = vld [vmem:[#allocation8 + $0x30] sm:$0xff]
    %v170 = vld [vmem:[#allocation8 + $0x38] sm:$0xff]
    %v171 = vld [vmem:[#allocation8 + $0x40] sm:$0xff]
    %v172 = vld [vmem:[#allocation8 + $0x48] sm:$0xff]
    %v173 = vld [vmem:[#allocation8 + $0x50] sm:$0xff]
    %v174 = vld [vmem:[#allocation8 + $0x58] sm:$0xff]
    %v175 = vld [vmem:[#allocation8 + $0x60] sm:$0xff]
    %v176 = vld [vmem:[#allocation8 + $0x68] sm:$0xff]
    %v177 = vld [vmem:[#allocation8 + $0x70] sm:$0xff]
    %v178 = vld [vmem:[#allocation8 + $0x78] sm:$0xff]
    %v179 = vld [vmem:[%s6] sm:$0x1]
    %v181 = vperm.slane %v179, 0
    %183 = vmatpush.msra.mxu0 %v178
    %184 = vmatpush.msra.mxu0 %v177
    %185 = vmatpush.msra.mxu0 %v176
    %186 = vmatpush.msra.mxu0 %v175
    %187 = vmatpush.msra.mxu0 %v174
    %188 = vmatpush.msra.mxu0 %v173
    %189 = vmatpush.msra.mxu0 %v172
    %190 = vmatpush.msra.mxu0 %v171
    %191 = vmatpush.msra.mxu0 %v170
    %192 = vmatpush.msra.mxu0 %v169
    %193 = vmatpush.msra.mxu0 %v168
    %194 = vmatpush.msra.mxu0 %v167
    %195 = vmatpush.msra.mxu0 %v166
    %196 = vmatpush.msra.mxu0 %v165
    %197 = vmatpush.msra.mxu0 %v164
    %198 = vmatpush.msra.mxu0 %v163
    %199 = vmatmul.f32.gmra.mxu0 %v162
    %v200 = vpop.f32.mrf.mxu0
    %v201 = vadd.f32 %v181, %v200
    %202 = vdwg.mxu0
    %v203 = vlaneseq
    %v204 = vand.u32 %v203, 127
    %v205 = vxor.u32 %v201, 2147483648
    %v206 = vmul.f32 %v205, 1.442695
    %v207 = vpow.pop %v206
    %v208 = vadd.f32 %v207, 1.0
    %v209 = vrcp.pop %v208
    %v210 = vmul.f32 %v208, %v209
    %v211 = vsub.f32 1.0, %v210
    %v212 = vmul.f32 %v209, %v211
    %v213 = vadd.f32 %v209, %v212
    %vm214 = vweird.f32 %v208
    %vm215 = vweird.f32 %v209
    %vm216 = vmor %vm214, %vm215
    %v217 = vsel %vm216, %v209, %v213
    %v218 = vand.u32 2147483647, %v208
    %vm219 = vcmp.eq.f32.partialorder %v218, 8.507059e+37
    %v220 = vand.u32 %v208, 2147483648
    %v221 = vor.u32 1.1754944e-38, %v220
    %v222 = vsel %vm219, %v221, %v217
    %v223 = vmul.f32 1.0, %v222
    %v224 = vmax.f32 %v201, 0.0
    %vm225 = vcmp.ne.f32.partialorder %v201, %v201
    %v226 = vadd.f32 %v201, 0.0
    %v227 = vand.u32 2147483647, %v201
    %v228 = vsub.f32 0.0, %v227
    %v229 = vmul.f32 %v228, 1.442695
    %v230 = vpow.pop %v229
    %v231 = vadd.f32 %v230, 1.0
    %v232 = vlog2.pop %v231
    %v233 = vmul.f32 %v232, 0.6931472
    %v234 = vmul.f32 -0.5, %v230
    %v235 = vadd.f32 %v234, 1.0
    %v236 = vmul.f32 %v235, %v230
    %v237 = vand.u32 2147483647, %v230
    %vm238 = vcmp.lt.f32.partialorder %v237, 0.0004427343
    %v239 = vsel %vm238, %v236, %v233
    %v240 = vadd.f32 %v224, %v239
    %v241 = vsel %vm225, %v226, %v240
    %v242 = vadd.f32 %v241, 0.01
    %vm243 = vcmp.lt.s32.totalorder %v204, 8
    %v244 = vsel %vm243, %v223, %v242
    %245 = vst [vmem:[#allocation10] sm:$0xff] %v244
    // Predicated region
    $region46: #{tpu_custom_call.1} parent=1 // pred_check
      _
    $region47: #{tpu_custom_call.1} parent=1 // pred_check_branch
      %247 = sbr.rel (0) target = $region49
    $region48: #{tpu_custom_call.1} parent=1 // pred_region
      %249 = vsyncadd [#allocation4], 0
      %s251 = sshll.u32 [#allocation10], 4
      %s252 = int_to_ptr.vmem [resolvable:$true] %s251
      %s253 = sshll.u32 %s7, 4
      %s254 = int_to_ptr.hbm [resolvable:$true] %s253
      %256 = dma.vmem_to_hbm [thread:$0]  %s252, 128, %s254, [#allocation4]
    $region49: #{tpu_custom_call.1} parent=1 // pred_fallthru
      _
    // Predicated region
    $region50: #{tpu_custom_call.1} parent=1 // pred_check
      _
    $region51: #{tpu_custom_call.1} parent=1 // pred_check_branch
      %258 = sbr.rel (0) target = $region53
    $region52: #{tpu_custom_call.1} parent=1 // pred_region
      %260 = dma.done [#allocation4], 128
    $region53: #{tpu_custom_call.1} parent=1 // pred_fallthru
      _
    %261 = vsyncpa [#allocation3], 1
    %262 = vsyncpa [#allocation6], 1
    %263 = vsyncpa [#allocation9], 1
    %264 = vsyncpa [#allocation4], 1

</llo_original>
